<compile_context>
chip_gen: v6e
topology: v6e:2x2x1
jax: 0.10.0
libtpu: 0.0.40
codegen_flags: <defaults>
</compile_context>

<pallas_src>
import functools

import jax
import jax.numpy as jnp
from jax.experimental import pallas as pl
from jax.experimental.pallas import tpu as pltpu


NEG_SLOPE = 0.01  # F.leaky_relu default
BN_EPS = 1e-5     # nn.BatchNorm1d default


def _leaky_relu(x):
    return jnp.where(x > 0, x, NEG_SLOPE * x)


def _round_up(n, m):
    return ((n + m - 1) // m) * m


def classification_kernel(
    x_ref,
    w1_ref, c1_ref,
    w2_ref, c2_ref,
    w3_ref, b3_ref,
    out_ref,
):
    x = x_ref[...]

    # lin1 (BN1 folded into w1/c1) + leaky_relu
    h = jnp.dot(x, w1_ref[...], preferred_element_type=jnp.float32) + c1_ref[...]
    h = _leaky_relu(h)

    # lin2 (BN2 folded into w2/c2) + leaky_relu
    h = jnp.dot(h, w2_ref[...], preferred_element_type=jnp.float32) + c2_ref[...]
    h = _leaky_relu(h)

    # lin3
    out_ref[...] = (
        jnp.dot(h, w3_ref[...], preferred_element_type=jnp.float32) + b3_ref[...]
    )


@functools.partial(jax.jit, static_argnames=("tile_n",))
def classification_layer(x, folded_params, *, tile_n=2048):
    """x: (N, out_lin) f32.  folded_params: (w1, c1, w2, c2, w3, b3)."""
    w1, c1, w2, c2, w3, b3 = folded_params
    n, f = x.shape
    d1 = w1.shape[1]
    d2 = w2.shape[1]
    n_cls = w3.shape[1]

    # Pick the batch tile: large for throughput, but never larger than (padded) N.
    tile_n = min(tile_n, _round_up(n, 8))
    n_pad = _round_up(n, tile_n)
    if n_pad != n:
        x = jnp.pad(x, ((0, n_pad - n), (0, 0)))
    grid = (n_pad // tile_n,)

    # VMEM budget: double-buffered x/out tiles + activations + resident weights,
    # with headroom; capped safely below v7x's 64 MiB physical VMEM.
    per_step_bytes = tile_n * (f + d1 + d2 + n_cls) * 4
    weight_bytes = 4 * sum(int(a.size) for a in (w1, c1, w2, c2, w3, b3))
    vmem_limit = int(min(48 << 20, max(16 << 20, 4 * per_step_bytes + 4 * weight_bytes)))

    def resident(arr):
        # Full-array block, constant index map -> stays in VMEM across grid steps.
        return pl.BlockSpec(arr.shape, lambda i: (0, 0))

    out = pl.pallas_call(
        classification_kernel,
        out_shape=jax.ShapeDtypeStruct((n_pad, n_cls), jnp.float32),
        grid=grid,
        in_specs=[
            pl.BlockSpec((tile_n, f), lambda i: (i, 0)),   # x: tiled over batch
            resident(w1), resident(c1),
            resident(w2), resident(c2),
            resident(w3), resident(b3),
        ],
        out_specs=pl.BlockSpec((tile_n, n_cls), lambda i: (i, 0)),
        compiler_params=pltpu.CompilerParams(
            dimension_semantics=("parallel",),   # megacore batch sharding on v7x
            vmem_limit_bytes=vmem_limit,
        ),
    )(x, w1, c1, w2, c2, w3, b3)

    return out[:n]


def make_params(key, out_lin, classification):
    """Deterministic synthetic parameters matching the PyTorch module structure."""
    d0, d1, d2 = out_lin, out_lin // 2, out_lin // 4
    ks = jax.random.split(key, 16)

    def lin(kw, kb, din, dout):
        w = jax.random.normal(kw, (din, dout), jnp.float32) * 0.1   # (in, out)
        b = jax.random.normal(kb, (1, dout), jnp.float32) * 0.1
        return w, b

    def bn(kg, kb, km, kv, d):
        gamma = 1.0 + 0.1 * jax.random.normal(kg, (1, d), jnp.float32)
        beta = 0.1 * jax.random.normal(kb, (1, d), jnp.float32)
        mean = 0.1 * jax.random.normal(km, (1, d), jnp.float32)
        var = 1.0 + 0.1 * jax.random.uniform(kv, (1, d), jnp.float32)
        return gamma, beta, mean, var

    w1, b1 = lin(ks[0], ks[1], d0, d1)
    bn1 = bn(ks[2], ks[3], ks[4], ks[5], d1)
    w2, b2 = lin(ks[6], ks[7], d1, d2)
    bn2 = bn(ks[8], ks[9], ks[10], ks[11], d2)
    w3, b3 = lin(ks[12], ks[13], d2, classification)
    return dict(w1=w1, b1=b1, bn1=bn1, w2=w2, b2=b2, bn2=bn2, w3=w3, b3=b3)


def fold_params(p, eps=BN_EPS):
    """Fold eval-mode BatchNorm into the preceding Linear: W'=W*s, c=(b-mean)*s+beta."""
    def fold(w, b, bn_params):
        gamma, beta, mean, var = bn_params
        scale = gamma / jnp.sqrt(var + eps)          # (1, out)
        return w * scale, (b - mean) * scale + beta  # columns scaled, bias folded

    w1, c1 = fold(p["w1"], p["b1"], p["bn1"])
    w2, c2 = fold(p["w2"], p["b2"], p["bn2"])
    return (w1, c1, w2, c2, p["w3"], p["b3"])


def reference(x, p, eps=BN_EPS):
    """Pure-JAX eval-mode forward pass using the *unfolded* module parameters."""
    def bn_eval(h, bn_params):
        gamma, beta, mean, var = bn_params
        return gamma * (h - mean) / jnp.sqrt(var + eps) + beta

    h = x @ p["w1"] + p["b1"]
    h = _leaky_relu(bn_eval(h, p["bn1"]))           # dropout identity in eval
    h = h @ p["w2"] + p["b2"]
    h = _leaky_relu(bn_eval(h, p["bn2"]))
    return h @ p["w3"] + p["b3"]


if __name__ == "__main__":
    key = jax.random.PRNGKey(0)
    k_x, k_p = jax.random.split(key)

    batch = 8
    out_lin = 32        # linear_param['out_lin']
    classification = 4  # linear_param['classification']

    x = jax.random.normal(k_x, (batch, out_lin), jnp.float32)
    params = make_params(k_p, out_lin, classification)
    folded = fold_params(params)

    out = classification_layer(x, folded)
    out = jax.block_until_ready(out)

    ref = reference(x, params)
    assert out.shape == (batch, classification), out.shape
    assert jnp.allclose(out, ref, atol=1e-4, rtol=1e-4), (
        float(jnp.max(jnp.abs(out - ref)))
    )
    print("KERNEL_OK")
</pallas_src>

<mosaic_0001>
module attributes {stable_mosaic.version = 11 : i64} {
  func.func @classification_kernel(%arg0: i32, %arg1: memref<8x32xf32, #tpu.memory_space<vmem>>, %arg2: memref<32x16xf32, #tpu.memory_space<vmem>>, %arg3: memref<1x16xf32, #tpu.memory_space<vmem>>, %arg4: memref<16x8xf32, #tpu.memory_space<vmem>>, %arg5: memref<1x8xf32, #tpu.memory_space<vmem>>, %arg6: memref<8x4xf32, #tpu.memory_space<vmem>>, %arg7: memref<1x4xf32, #tpu.memory_space<vmem>>, %arg8: memref<8x4xf32, #tpu.memory_space<vmem>>) attributes {dimension_semantics = [#tpu.dimension_semantics<parallel>], iteration_bounds = array<i64: 1>, scalar_prefetch = 0 : i64, scratch_operands = 0 : i64, tpu.core_type = #tpu.core_type<tc>, window_params = [{transform_indices = @transform_0, window_bounds = array<i64: 8, 32>}, {pipeline_mode = #tpu.pipeline_mode<synchronous>, transform_indices = @transform_1, window_bounds = array<i64: 32, 16>}, {pipeline_mode = #tpu.pipeline_mode<synchronous>, transform_indices = @transform_2, window_bounds = array<i64: 1, 16>}, {pipeline_mode = #tpu.pipeline_mode<synchronous>, transform_indices = @transform_3, window_bounds = array<i64: 16, 8>}, {pipeline_mode = #tpu.pipeline_mode<synchronous>, transform_indices = @transform_4, window_bounds = array<i64: 1, 8>}, {pipeline_mode = #tpu.pipeline_mode<synchronous>, transform_indices = @transform_5, window_bounds = array<i64: 8, 4>}, {pipeline_mode = #tpu.pipeline_mode<synchronous>, transform_indices = @transform_6, window_bounds = array<i64: 1, 4>}, {transform_indices = @transform_7, window_bounds = array<i64: 8, 4>}]} {
    %c0 = arith.constant 0 : index
    %c0_0 = arith.constant 0 : index
    %0 = vector.load %arg1[%c0, %c0_0] : memref<8x32xf32, #tpu.memory_space<vmem>>, vector<8x32xf32>
    %c0_1 = arith.constant 0 : index
    %c0_2 = arith.constant 0 : index
    %1 = vector.load %arg2[%c0_1, %c0_2] : memref<32x16xf32, #tpu.memory_space<vmem>>, vector<32x16xf32>
    %cst = arith.constant dense<0.000000e+00> : vector<8x16xf32>
    %2 = tpu.matmul %0, %1, %cst {dimension_numbers = #tpu.dot_dimension_numbers<[1], [0], [0], [1], [0, 0, 1, 1], [], []>} : vector<8x32xf32>, vector<32x16xf32>, vector<8x16xf32> -> vector<8x16xf32>
    %c0_3 = arith.constant 0 : index
    %c0_4 = arith.constant 0 : index
    %3 = vector.load %arg3[%c0_3, %c0_4] : memref<1x16xf32, #tpu.memory_space<vmem>>, vector<1x16xf32>
    %4 = vector.broadcast %3 : vector<1x16xf32> to vector<8x16xf32>
    %5 = arith.addf %2, %4 : vector<8x16xf32>
    %cst_5 = arith.constant 0.000000e+00 : f32
    %6 = vector.broadcast %cst_5 : f32 to vector<8x16xf32>
    %7 = arith.cmpf ogt, %5, %6 : vector<8x16xf32>
    %cst_6 = arith.constant 0.00999999977 : f32
    %8 = vector.broadcast %cst_6 : f32 to vector<8x16xf32>
    %9 = arith.mulf %8, %5 : vector<8x16xf32>
    %10 = arith.select %7, %5, %9 : vector<8x16xi1>, vector<8x16xf32>
    %c0_7 = arith.constant 0 : index
    %c0_8 = arith.constant 0 : index
    %11 = vector.load %arg4[%c0_7, %c0_8] : memref<16x8xf32, #tpu.memory_space<vmem>>, vector<16x8xf32>
    %cst_9 = arith.constant dense<0.000000e+00> : vector<8x8xf32>
    %12 = tpu.matmul %10, %11, %cst_9 {dimension_numbers = #tpu.dot_dimension_numbers<[1], [0], [0], [1], [0, 0, 1, 1], [], []>} : vector<8x16xf32>, vector<16x8xf32>, vector<8x8xf32> -> vector<8x8xf32>
    %c0_10 = arith.constant 0 : index
    %c0_11 = arith.constant 0 : index
    %13 = vector.load %arg5[%c0_10, %c0_11] : memref<1x8xf32, #tpu.memory_space<vmem>>, vector<1x8xf32>
    %14 = vector.broadcast %13 : vector<1x8xf32> to vector<8x8xf32>
    %15 = arith.addf %12, %14 : vector<8x8xf32>
    %cst_12 = arith.constant 0.000000e+00 : f32
    %16 = vector.broadcast %cst_12 : f32 to vector<8x8xf32>
    %17 = arith.cmpf ogt, %15, %16 : vector<8x8xf32>
    %cst_13 = arith.constant 0.00999999977 : f32
    %18 = vector.broadcast %cst_13 : f32 to vector<8x8xf32>
    %19 = arith.mulf %18, %15 : vector<8x8xf32>
    %20 = arith.select %17, %15, %19 : vector<8x8xi1>, vector<8x8xf32>
    %c0_14 = arith.constant 0 : index
    %c0_15 = arith.constant 0 : index
    %21 = vector.load %arg6[%c0_14, %c0_15] : memref<8x4xf32, #tpu.memory_space<vmem>>, vector<8x4xf32>
    %cst_16 = arith.constant dense<0.000000e+00> : vector<8x4xf32>
    %22 = tpu.matmul %20, %21, %cst_16 {dimension_numbers = #tpu.dot_dimension_numbers<[1], [0], [0], [1], [0, 0, 1, 1], [], []>} : vector<8x8xf32>, vector<8x4xf32>, vector<8x4xf32> -> vector<8x4xf32>
    %c0_17 = arith.constant 0 : index
    %c0_18 = arith.constant 0 : index
    %23 = vector.load %arg7[%c0_17, %c0_18] : memref<1x4xf32, #tpu.memory_space<vmem>>, vector<1x4xf32>
    %24 = vector.broadcast %23 : vector<1x4xf32> to vector<8x4xf32>
    %25 = arith.addf %22, %24 : vector<8x4xf32>
    %c0_19 = arith.constant 0 : index
    %c0_20 = arith.constant 0 : index
    %26 = vector.load %arg8[%c0_19, %c0_20] : memref<8x4xf32, #tpu.memory_space<vmem>>, vector<8x4xf32>
    tpu.vector_store %arg8[%c0_19, %c0_20], %25 {strides = array<i32>} : memref<8x4xf32, #tpu.memory_space<vmem>>, vector<8x4xf32>,
    return
  }
  func.func @transform_0(%arg0: i32) -> (i32, i32) {
    %c0_i32 = arith.constant 0 : i32
    %c0_i32_0 = arith.constant 0 : i32
    return %arg0, %c0_i32 : i32, i32
  }
  func.func @transform_1(%arg0: i32) -> (i32, i32) {
    %c0_i32 = arith.constant 0 : i32
    %c0_i32_0 = arith.constant 0 : i32
    %c0_i32_1 = arith.constant 0 : i32
    return %c0_i32, %c0_i32_0 : i32, i32
  }
  func.func @transform_2(%arg0: i32) -> (i32, i32) {
    %c0_i32 = arith.constant 0 : i32
    %c0_i32_0 = arith.constant 0 : i32
    %c0_i32_1 = arith.constant 0 : i32
    return %c0_i32, %c0_i32_0 : i32, i32
  }
  func.func @transform_3(%arg0: i32) -> (i32, i32) {
    %c0_i32 = arith.constant 0 : i32
    %c0_i32_0 = arith.constant 0 : i32
    %c0_i32_1 = arith.constant 0 : i32
    return %c0_i32, %c0_i32_0 : i32, i32
  }
  func.func @transform_4(%arg0: i32) -> (i32, i32) {
    %c0_i32 = arith.constant 0 : i32
    %c0_i32_0 = arith.constant 0 : i32
    %c0_i32_1 = arith.constant 0 : i32
    return %c0_i32, %c0_i32_0 : i32, i32
  }
  func.func @transform_5(%arg0: i32) -> (i32, i32) {
    %c0_i32 = arith.constant 0 : i32
    %c0_i32_0 = arith.constant 0 : i32
    %c0_i32_1 = arith.constant 0 : i32
    return %c0_i32, %c0_i32_0 : i32, i32
  }
  func.func @transform_6(%arg0: i32) -> (i32, i32) {
    %c0_i32 = arith.constant 0 : i32
    %c0_i32_0 = arith.constant 0 : i32
    %c0_i32_1 = arith.constant 0 : i32
    return %c0_i32, %c0_i32_0 : i32, i32
  }
  func.func @transform_7(%arg0: i32) -> (i32, i32) {
    %c0_i32 = arith.constant 0 : i32
    %c0_i32_0 = arith.constant 0 : i32
    return %arg0, %c0_i32 : i32, i32
  }
}

</mosaic_0001>

<llo_original>
// kernel: classification_layer.1
$region0: #{classification_layer.1}
  #allocation0 [shape = 'u32[]', space=smem, size = 0x4, offset = 0x4, fixed_abs, tag = 'smem constant byte address 0x4 - core index']
  #allocation1 [shape = 'u32[144,128]{1,0:T(1,128)}', space=vmem, size = 0x12000, scoped, tag = 'internal scratch']
  %s0 = inlined_call_operand.vmem [shape: f32[8,32], index: 0, kind: input, shape index: {}]
  %s1 = inlined_call_operand.vmem [shape: f32[32,16], index: 1, kind: input, shape index: {}]
  %s2 = inlined_call_operand.vmem [shape: f32[1,16], index: 2, kind: input, shape index: {}]
  %s3 = inlined_call_operand.vmem [shape: f32[16,8], index: 3, kind: input, shape index: {}]
  %s4 = inlined_call_operand.vmem [shape: f32[1,8], index: 4, kind: input, shape index: {}]
  %s5 = inlined_call_operand.vmem [shape: f32[8,4], index: 5, kind: input, shape index: {}]
  %s6 = inlined_call_operand.vmem [shape: f32[1,4], index: 6, kind: input, shape index: {}]
  %s7 = inlined_call_operand.vmem [shape: f32[8,4], index: 7, kind: output, shape index: {}]
  %s8 = sld [smem:[#allocation0]]
  $region38: #{classification_layer.1} parent=0
    _
  %s10 = ssub.s32 1, %s8
  %s11 = scalar_select 0, %s10, %s8
  // Predicated region
  $region2: #{classification_layer.1} parent=0 // pred_check
    _
  $region3: #{classification_layer.1} parent=0 // pred_check_branch
    %13 = sbr.rel (0) target = $region5
  $region4: #{classification_layer.1} parent=0 // pred_region
    _
  $region5: #{classification_layer.1} parent=0 // pred_fallthru
    _
  // Predicated region
  $region6: #{classification_layer.1} parent=0 // pred_check
    _
  $region7: #{classification_layer.1} parent=0 // pred_check_branch
    %15 = sbr.rel (0) target = $region9
  $region8: #{classification_layer.1} parent=0 // pred_region
    _
  $region9: #{classification_layer.1} parent=0 // pred_fallthru
    _
  // Predicated region
  $region10: #{classification_layer.1} parent=0 // pred_check
    _
  $region11: #{classification_layer.1} parent=0 // pred_check_branch
    %17 = sbr.rel (0) target = $region13
  $region12: #{classification_layer.1} parent=0 // pred_region
    _
  $region13: #{classification_layer.1} parent=0 // pred_fallthru
    _
  // Predicated region
  $region14: #{classification_layer.1} parent=0 // pred_check
    _
  $region15: #{classification_layer.1} parent=0 // pred_check_branch
    %19 = sbr.rel (0) target = $region17
  $region16: #{classification_layer.1} parent=0 // pred_region
    _
  $region17: #{classification_layer.1} parent=0 // pred_fallthru
    _
  // Predicated region
  $region18: #{classification_layer.1} parent=0 // pred_check
    _
  $region19: #{classification_layer.1} parent=0 // pred_check_branch
    %21 = sbr.rel (0) target = $region21
  $region20: #{classification_layer.1} parent=0 // pred_region
    _
  $region21: #{classification_layer.1} parent=0 // pred_fallthru
    _
  // Predicated region
  $region22: #{classification_layer.1} parent=0 // pred_check
    _
  $region23: #{classification_layer.1} parent=0 // pred_check_branch
    %23 = sbr.rel (0) target = $region25
  $region24: #{classification_layer.1} parent=0 // pred_region
    _
  $region25: #{classification_layer.1} parent=0 // pred_fallthru
    _
  // Predicated region
  $region26: #{classification_layer.1} parent=0 // pred_check
    _
  $region27: #{classification_layer.1} parent=0 // pred_check_branch
    %25 = sbr.rel (0) target = $region29
  $region28: #{classification_layer.1} parent=0 // pred_region
    _
  $region29: #{classification_layer.1} parent=0 // pred_fallthru
    _
  %v26 = vld [vmem:[%s0] sm:$0xff]
  %v27 = vld [vmem:[%s1] sm:$0xff]
  %v28 = vld [vmem:[%s1 + $0x8] sm:$0xff]
  %v29 = vld [vmem:[%s1 + $0x10] sm:$0xff]
  %v30 = vld [vmem:[%s1 + $0x18] sm:$0xff]
  %v31 = vld [vmem:[%s2] sm:$0x1]
  %v33 = vlaneseq
  %v34 = vshrl.u32 %v33, 7
  %v35 = vsub.s32 0, %v34
  %v36 = vrot.slane %v31, %v35
  %vm38 = vcmask 261120
  %v40 = vsel %vm38, %v26, 0
  %42 = vmatprep.subr.mxu0 0.0
  %43 = vmatpush1.msra.mxu0 0.0
  %44 = vmatprep.subr.mxu0 0.0
  %45 = vmatpush1.msra.mxu0 0.0
  %46 = vmatprep.subr.mxu0 0.0
  %47 = vmatpush1.msra.mxu0 0.0
  %48 = vmatprep.subr.mxu0 0.0
  %49 = vmatpush1.msra.mxu0 0.0
  %50 = vmatprep.subr.mxu0 0.0
  %51 = vmatpush1.msra.mxu0 0.0
  %52 = vmatprep.subr.mxu0 0.0
  %53 = vmatpush1.msra.mxu0 0.0
  %54 = vmatprep.subr.mxu0 0.0
  %55 = vmatpush1.msra.mxu0 0.0
  %56 = vmatprep.subr.mxu0 0.0
  %57 = vmatpush1.msra.mxu0 0.0
  %58 = vmatprep.subr.mxu0 0.0
  %59 = vmatpush1.msra.mxu0 0.0
  %60 = vmatprep.subr.mxu0 0.0
  %61 = vmatpush1.msra.mxu0 0.0
  %62 = vmatprep.subr.mxu0 0.0
  %63 = vmatpush1.msra.mxu0 0.0
  %64 = vmatprep.subr.mxu0 0.0
  %65 = vmatpush1.msra.mxu0 0.0
  %66 = vmatprep.subr.mxu0 0.0
  %67 = vmatpush1.msra.mxu0 %v30
  %68 = vmatprep.subr.mxu0 0.0
  %69 = vmatpush1.msra.mxu0 %v29
  %70 = vmatprep.subr.mxu0 0.0
  %71 = vmatpush1.msra.mxu0 %v28
  %72 = vmatprep.subr.mxu0 0.0
  %73 = vmatpush1.msra.mxu0 %v27
  %74 = vmatprep.subr.mxu0 0.0
  %75 = vmatpush2.msra.mxu0 0.0
  %76 = vmatprep.subr.mxu0 0.0
  %77 = vmatpush2.msra.mxu0 0.0
  %78 = vmatprep.subr.mxu0 0.0
  %79 = vmatpush2.msra.mxu0 0.0
  %80 = vmatprep.subr.mxu0 0.0
  %81 = vmatpush2.msra.mxu0 0.0
  %82 = vmatprep.subr.mxu0 0.0
  %83 = vmatpush2.msra.mxu0 0.0
  %84 = vmatprep.subr.mxu0 0.0
  %85 = vmatpush2.msra.mxu0 0.0
  %86 = vmatprep.subr.mxu0 0.0
  %87 = vmatpush2.msra.mxu0 0.0
  %88 = vmatprep.subr.mxu0 0.0
  %89 = vmatpush2.msra.mxu0 0.0
  %90 = vmatprep.subr.mxu0 0.0
  %91 = vmatpush2.msra.mxu0 0.0
  %92 = vmatprep.subr.mxu0 0.0
  %93 = vmatpush2.msra.mxu0 0.0
  %94 = vmatprep.subr.mxu0 0.0
  %95 = vmatpush2.msra.mxu0 0.0
  %96 = vmatprep.subr.mxu0 0.0
  %97 = vmatpush2.msra.mxu0 0.0
  %98 = vmatprep.subr.mxu0 0.0
  %99 = vmatpush2.msra.mxu0 0.0
  %100 = vmatprep.subr.mxu0 0.0
  %101 = vmatpush2.msra.mxu0 0.0
  %102 = vmatprep.subr.mxu0 0.0
  %103 = vmatpush2.msra.mxu0 0.0
  %104 = vmatprep.subr.mxu0 0.0
  %105 = vmatpush2.msra.mxu0 0.0
  %106 = vmatprep.mubr.f32.mxu0 0.0
  %107 = vmatmul.mubr.f32.gmra.mxu0 %v40
  %v108 = vpop.f32.mrf.mxu0
  %v109 = vadd.f32 %v36, %v108
  %v110 = vpop.f32.mrf.mxu0
  %111 = vdwg.mxu0
  %vm112 = vcmp.gt.f32.partialorder %v109, 0.0
  %v113 = vmul.f32 %v109, 0.01
  %v114 = vsel %vm112, %v109, %v113
  %v115 = vld [vmem:[%s3] sm:$0xff]
  %v116 = vld [vmem:[%s3 + $0x8] sm:$0xff]
  %v117 = vld [vmem:[%s4] sm:$0x1]
  %v119 = vlaneseq
  %v120 = vshrl.u32 %v119, 7
  %v121 = vsub.s32 0, %v120
  %v122 = vrot.slane %v117, %v121
  %vm124 = vcmask 130048
  %v126 = vsel %vm124, %v114, 0
  %128 = vmatprep.subr.mxu0 0.0
  %129 = vmatpush1.msra.mxu0 0.0
  %130 = vmatprep.subr.mxu0 0.0
  %131 = vmatpush1.msra.mxu0 0.0
  %132 = vmatprep.subr.mxu0 0.0
  %133 = vmatpush1.msra.mxu0 0.0
  %134 = vmatprep.subr.mxu0 0.0
  %135 = vmatpush1.msra.mxu0 0.0
  %136 = vmatprep.subr.mxu0 0.0
  %137 = vmatpush1.msra.mxu0 0.0
  %138 = vmatprep.subr.mxu0 0.0
  %139 = vmatpush1.msra.mxu0 0.0
  %140 = vmatprep.subr.mxu0 0.0
  %141 = vmatpush1.msra.mxu0 0.0
  %142 = vmatprep.subr.mxu0 0.0
  %143 = vmatpush1.msra.mxu0 0.0
  %144 = vmatprep.subr.mxu0 0.0
  %145 = vmatpush1.msra.mxu0 0.0
  %146 = vmatprep.subr.mxu0 0.0
  %147 = vmatpush1.msra.mxu0 0.0
  %148 = vmatprep.subr.mxu0 0.0
  %149 = vmatpush1.msra.mxu0 0.0
  %150 = vmatprep.subr.mxu0 0.0
  %151 = vmatpush1.msra.mxu0 0.0
  %152 = vmatprep.subr.mxu0 0.0
  %153 = vmatpush1.msra.mxu0 0.0
  %154 = vmatprep.subr.mxu0 0.0
  %155 = vmatpush1.msra.mxu0 0.0
  %156 = vmatprep.subr.mxu0 0.0
  %157 = vmatpush1.msra.mxu0 %v116
  %158 = vmatprep.subr.mxu0 0.0
  %159 = vmatpush1.msra.mxu0 %v115
  %160 = vmatprep.subr.mxu0 0.0
  %161 = vmatpush2.msra.mxu0 0.0
  %162 = vmatprep.subr.mxu0 0.0
  %163 = vmatpush2.msra.mxu0 0.0
  %164 = vmatprep.subr.mxu0 0.0
  %165 = vmatpush2.msra.mxu0 0.0
  %166 = vmatprep.subr.mxu0 0.0
  %167 = vmatpush2.msra.mxu0 0.0
  %168 = vmatprep.subr.mxu0 0.0
  %169 = vmatpush2.msra.mxu0 0.0
  %170 = vmatprep.subr.mxu0 0.0
  %171 = vmatpush2.msra.mxu0 0.0
  %172 = vmatprep.subr.mxu0 0.0
  %173 = vmatpush2.msra.mxu0 0.0
  %174 = vmatprep.subr.mxu0 0.0
  %175 = vmatpush2.msra.mxu0 0.0
  %176 = vmatprep.subr.mxu0 0.0
  %177 = vmatpush2.msra.mxu0 0.0
  %178 = vmatprep.subr.mxu0 0.0
  %179 = vmatpush2.msra.mxu0 0.0
  %180 = vmatprep.subr.mxu0 0.0
  %181 = vmatpush2.msra.mxu0 0.0
  %182 = vmatprep.subr.mxu0 0.0
  %183 = vmatpush2.msra.mxu0 0.0
  %184 = vmatprep.subr.mxu0 0.0
  %185 = vmatpush2.msra.mxu0 0.0
  %186 = vmatprep.subr.mxu0 0.0
  %187 = vmatpush2.msra.mxu0 0.0
  %188 = vmatprep.subr.mxu0 0.0
  %189 = vmatpush2.msra.mxu0 0.0
  %190 = vmatprep.subr.mxu0 0.0
  %191 = vmatpush2.msra.mxu0 0.0
  %192 = vmatprep.mubr.f32.mxu0 0.0
  %193 = vmatmul.mubr.f32.gmra.mxu0 %v126
  %v194 = vpop.f32.mrf.mxu0
  %v195 = vadd.f32 %v122, %v194
  %v196 = vpop.f32.mrf.mxu0
  %197 = vdwg.mxu0
  %vm198 = vcmp.gt.f32.partialorder %v195, 0.0
  %v199 = vmul.f32 %v195, 0.01
  %v200 = vsel %vm198, %v195, %v199
  %v201 = vld [vmem:[%s5] sm:$0xff]
  %v202 = vld [vmem:[%s6] sm:$0x1]
  %v204 = vlaneseq
  %v205 = vshrl.u32 %v204, 7
  %v206 = vsub.s32 0, %v205
  %v207 = vrot.slane %v202, %v206
  %vm209 = vcmask 64512
  %v211 = vsel %vm209, %v200, 0
  %213 = vmatprep.subr.mxu0 0.0
  %214 = vmatpush1.msra.mxu0 0.0
  %215 = vmatprep.subr.mxu0 0.0
  %216 = vmatpush1.msra.mxu0 0.0
  %217 = vmatprep.subr.mxu0 0.0
  %218 = vmatpush1.msra.mxu0 0.0
  %219 = vmatprep.subr.mxu0 0.0
  %220 = vmatpush1.msra.mxu0 0.0
  %221 = vmatprep.subr.mxu0 0.0
  %222 = vmatpush1.msra.mxu0 0.0
  %223 = vmatprep.subr.mxu0 0.0
  %224 = vmatpush1.msra.mxu0 0.0
  %225 = vmatprep.subr.mxu0 0.0
  %226 = vmatpush1.msra.mxu0 0.0
  %227 = vmatprep.subr.mxu0 0.0
  %228 = vmatpush1.msra.mxu0 0.0
  %229 = vmatprep.subr.mxu0 0.0
  %230 = vmatpush1.msra.mxu0 0.0
  %231 = vmatprep.subr.mxu0 0.0
  %232 = vmatpush1.msra.mxu0 0.0
  %233 = vmatprep.subr.mxu0 0.0
  %234 = vmatpush1.msra.mxu0 0.0
  %235 = vmatprep.subr.mxu0 0.0
  %236 = vmatpush1.msra.mxu0 0.0
  %237 = vmatprep.subr.mxu0 0.0
  %238 = vmatpush1.msra.mxu0 0.0
  %239 = vmatprep.subr.mxu0 0.0
  %240 = vmatpush1.msra.mxu0 0.0
  %241 = vmatprep.subr.mxu0 0.0
  %242 = vmatpush1.msra.mxu0 0.0
  %243 = vmatprep.subr.mxu0 0.0
  %244 = vmatpush1.msra.mxu0 %v201
  %245 = vmatprep.subr.mxu0 0.0
  %246 = vmatpush2.msra.mxu0 0.0
  %247 = vmatprep.subr.mxu0 0.0
  %248 = vmatpush2.msra.mxu0 0.0
  %249 = vmatprep.subr.mxu0 0.0
  %250 = vmatpush2.msra.mxu0 0.0
  %251 = vmatprep.subr.mxu0 0.0
  %252 = vmatpush2.msra.mxu0 0.0
  %253 = vmatprep.subr.mxu0 0.0
  %254 = vmatpush2.msra.mxu0 0.0
  %255 = vmatprep.subr.mxu0 0.0
  %256 = vmatpush2.msra.mxu0 0.0
  %257 = vmatprep.subr.mxu0 0.0
  %258 = vmatpush2.msra.mxu0 0.0
  %259 = vmatprep.subr.mxu0 0.0
  %260 = vmatpush2.msra.mxu0 0.0
  %261 = vmatprep.subr.mxu0 0.0
  %262 = vmatpush2.msra.mxu0 0.0
  %263 = vmatprep.subr.mxu0 0.0
  %264 = vmatpush2.msra.mxu0 0.0
  %265 = vmatprep.subr.mxu0 0.0
  %266 = vmatpush2.msra.mxu0 0.0
  %267 = vmatprep.subr.mxu0 0.0
  %268 = vmatpush2.msra.mxu0 0.0
  %269 = vmatprep.subr.mxu0 0.0
  %270 = vmatpush2.msra.mxu0 0.0
  %271 = vmatprep.subr.mxu0 0.0
  %272 = vmatpush2.msra.mxu0 0.0
  %273 = vmatprep.subr.mxu0 0.0
  %274 = vmatpush2.msra.mxu0 0.0
  %275 = vmatprep.subr.mxu0 0.0
  %276 = vmatpush2.msra.mxu0 0.0
  %277 = vmatprep.mubr.f32.mxu0 0.0
  %278 = vmatmul.mubr.f32.gmra.mxu0 %v211
  %v279 = vpop.f32.mrf.mxu0
  %v280 = vadd.f32 %v207, %v279
  %v281 = vpop.f32.mrf.mxu0
  %282 = vdwg.mxu0
  %vm283 = vcmask 31744
  %284 = vst.msk [vmem:[%s7] sm:$0xff] %vm283, %v280
  // Predicated region
  $region30: #{classification_layer.1} parent=0 // pred_check
    _
  $region31: #{classification_layer.1} parent=0 // pred_check_branch
    %286 = sbr.rel (0) target = $region33
  $region32: #{classification_layer.1} parent=0 // pred_region
    _
  $region33: #{classification_layer.1} parent=0 // pred_fallthru
    _
  // Predicated region
  $region34: #{classification_layer.1} parent=0 // pred_check
    _
  $region35: #{classification_layer.1} parent=0 // pred_check_branch
    %288 = sbr.rel (0) target = $region37
  $region36: #{classification_layer.1} parent=0 // pred_region
    _
  $region37: #{classification_layer.1} parent=0 // pred_fallthru
    _

</llo_original>
